<compile_context>
chip_gen: v5e
topology: v5e:2x2
jax: 0.10.0
libtpu: 0.0.40
codegen_flags: <defaults>
</compile_context>

<pallas_src>
import functools

import jax
import jax.numpy as jnp
from jax.experimental import pallas as pl
from jax.experimental.pallas import tpu as pltpu

EPS = 1e-8  # clamp floor used by quantize_activation_per_token_asym


# ---------------------------------------------------------------------------
# Kernels
# ---------------------------------------------------------------------------
def _quant_linear_kernel(pt_ref, inv_ss_ref, x_ref, w_ref, b_ref, o_ref,
                         xq_ref, acc_ref, *, smooth, act_quant, act_pertoken,
                         act_bits, tk, K):
    """Grid step (i, j, k).

    pt_ref     : SMEM f32[3]       -> per-tensor [scale, zero, 1/scale]
    inv_ss_ref : VMEM f32[1, K]    -> 1 / smooth_scales
    x_ref      : VMEM bf16[tm, K]  -> token tile, full feature axis
    w_ref      : VMEM bf16[tk, tn] -> weight tile ([in, out] layout)
    b_ref      : VMEM f32[1, tn]
    o_ref      : VMEM [tm, tn]
    xq_ref     : VMEM bf16[tm, K]  scratch (smoothed / fake-quantized x)
    acc_ref    : VMEM f32[tm, tn]  scratch accumulator
    """
    j = pl.program_id(1)
    k = pl.program_id(2)
    nk = pl.num_programs(2)

    # Prologue ONCE per token tile i (at j == 0, k == 0): smooth + fake-quant
    # the full-K token tile and cache it in bf16 scratch.  The per-token
    # min/max must see the whole feature axis, so x is not tiled along K.
    @pl.when((j == 0) & (k == 0))
    def _prologue():
        x = x_ref[...].astype(jnp.float32)
        if smooth:
            x = x * inv_ss_ref[...]          # multiply by precomputed 1/scales
        if act_quant:
            maxq = float(2 ** act_bits - 1)
            if act_pertoken:
                # quantize_activation_per_token_asym (reduce over features)
                xmax = jnp.max(x, axis=1, keepdims=True)
                xmin = jnp.min(x, axis=1, keepdims=True)
                scale = jnp.clip((xmax - xmin) / maxq, EPS, 10000.0)
                inv_scale = pl.reciprocal(scale, approx=False)
                zero = jnp.round(-xmin * inv_scale)
                q = jnp.clip(jnp.round(x * inv_scale) + zero, 0.0, maxq)
                x = scale * (q - zero)
            else:
                # quantize_activation_per_tensor_asym (global stats via SMEM)
                scale = pt_ref[0]
                zero = pt_ref[1]
                inv_scale = pt_ref[2]
                q = jnp.clip(jnp.round(x * inv_scale) + zero, 0.0, maxq)
                x = scale * (q - zero)
        xq_ref[...] = x.astype(xq_ref.dtype)

    # Steady state: bf16 MXU matmul of the k-th cached activation slice
    # against the [tk, tn] ([in, out]-layout) weight tile.
    if K == tk:                      # K not tiled -> whole cached tile
        xk = xq_ref[...]
    else:
        off = pl.multiple_of(k * tk, tk)
        xk = xq_ref[:, pl.ds(off, tk)]
    part = jnp.dot(xk, w_ref[...], preferred_element_type=jnp.float32)

    @pl.when(k == 0)
    def _init():
        acc_ref[...] = part           # direct write, no zero-fill pass

    @pl.when(k != 0)
    def _accum():
        acc_ref[...] += part

    # Epilogue at last k: bias add + cast + lane-dense store.
    @pl.when(k == nk - 1)
    def _epilogue():
        o_ref[...] = (acc_ref[...] + b_ref[...]).astype(o_ref.dtype)


def _plain_linear_kernel(x_ref, w_ref, b_ref, o_ref, acc_ref):
    """Plain F.linear path: streamed bf16 matmul, no quant scratch."""
    k = pl.program_id(2)
    nk = pl.num_programs(2)
    part = jnp.dot(x_ref[...], w_ref[...], preferred_element_type=jnp.float32)

    @pl.when(k == 0)
    def _init():
        acc_ref[...] = part

    @pl.when(k != 0)
    def _accum():
        acc_ref[...] += part

    @pl.when(k == nk - 1)
    def _epilogue():
        o_ref[...] = (acc_ref[...] + b_ref[...]).astype(o_ref.dtype)


# ---------------------------------------------------------------------------
# Wrapper
# ---------------------------------------------------------------------------
def _round_up(v, m):
    return (v + m - 1) // m * m


def _device_defaults():
    """(tm target, VMEM budget bytes) per TPU generation."""
    try:
        kind = jax.devices()[0].device_kind.lower()
    except Exception:
        kind = ""
    if "v7" in kind:
        return 512, 48 << 20          # 64 MiB physical -> leave headroom
    if "v6" in kind:
        return 1024, 96 << 20         # weight-BW break-even needs large tm
    if "v5" in kind:
        return 256, 64 << 20          # already near roofline at tm=256
    return 512, 48 << 20


def smooth_quant_linear(x, weight, bias=None, smooth_scales=None, *,
                        smooth=False, act_quant=False, act_bits=8,
                        act_pertoken=False, tm=None, tn=512, tk=1024,
                        matmul_dtype=jnp.bfloat16,
                        x_stream_dtype=jnp.bfloat16):
    """JAX wrapper reproducing SmoothAndQuantLinear.forward.

    x: [tokens, in_features], weight: [out_features, in_features],
    bias: [1, out_features] or None, smooth_scales: [in_features] or None.
    """
    M, K = x.shape
    N, Kw = weight.shape
    assert K == Kw
    out_dtype = x.dtype
    out_bytes = jnp.dtype(out_dtype).itemsize
    x_bytes = jnp.dtype(x_stream_dtype).itemsize

    if smooth and smooth_scales is None:
        smooth = False                 # reference: no divide without scales
    fused = smooth or act_quant        # does the kernel need the prologue?

    tm_target, vmem_budget = _device_defaults()
    if tm is None:
        tm = tm_target

    # --- smooth scales -> reciprocal (multiply in the kernel, not divide) ---
    if smooth:
        inv_ss = (1.0 / smooth_scales.astype(jnp.float32)).reshape(1, K)
    else:
        inv_ss = jnp.ones((1, K), dtype=jnp.float32)

    # Stream x in reduced precision; the kernel upcasts to f32 for the math.
    x_dev = x.astype(x_stream_dtype)

    # --- per-tensor quant parameters (tiny global reduction, JAX glue) ------
    if act_quant and not act_pertoken:
        maxq = float(2 ** act_bits - 1)
        xs = x_dev.astype(jnp.float32)
        if smooth:
            xs = xs * inv_ss
        xmax = jnp.max(xs)
        xmin = jnp.min(xs)
        scale = (xmax - xmin) / maxq   # unclamped, exactly like the reference
        zero = jnp.round(-xmin / scale)
        pt = jnp.stack([scale, zero, 1.0 / scale]).astype(jnp.float32)
    else:
        pt = jnp.array([1.0, 0.0, 1.0], dtype=jnp.float32)

    # --- tile selection ------------------------------------------------------
    tn = tn if N > tn else N
    Np = _round_up(N, tn)
    # K is never padded (per-token min/max + smoothing need the real feature
    # axis): only tile K with a divisor of K.
    tk_sel = K
    for cand in sorted({tk, 1024, 512, 256, 128}, reverse=True):
        if cand <= K and K % cand == 0:
            tk_sel = cand
            break
    tk = tk_sel

    tm = min(tm, _round_up(M, 16))     # 16 -> full bf16 sublane packing

    def _est(tm_):
        e = 2 * tk * tn * 2            # weight tiles (bf16, double-buffered)
        e += 2 * tn * 4                # bias
        e += 2 * tm_ * tn * out_bytes  # output block
        e += tm_ * tn * 4              # f32 accumulator scratch
        if fused:
            e += 2 * tm_ * K * x_bytes         # full-K x block
            e += tm_ * K * 2                   # xq bf16 scratch
            e += 2 * K * 4                     # inv_ss
            temps = 3 if act_quant else 1      # prologue f32 temporaries
            e += temps * tm_ * K * 4
        else:
            e += 2 * tm_ * tk * x_bytes        # streamed x tiles
        return e

    while tm > 16 and _est(tm) > vmem_budget:
        tm = max(16, tm // 2)
    Mp = _round_up(M, tm)

    # --- pad tokens / out_features (padding is discarded at the end) --------
    if Mp != M:
        x_dev = jnp.pad(x_dev, ((0, Mp - M), (0, 0)))
    # Pre-transpose weight to [K, N] ONCE so the MXU consumes a lane-dense
    # (tk, tn) tile with a plain jnp.dot (no per-tile transpose).
    w = weight.astype(matmul_dtype).T          # [K, N]
    if Np != N:
        w = jnp.pad(w, ((0, 0), (0, Np - N)))
    if bias is None:
        b = jnp.zeros((1, Np), dtype=jnp.float32)
    else:
        b = jnp.asarray(bias).reshape(1, N).astype(jnp.float32)
        if Np != N:
            b = jnp.pad(b, ((0, 0), (0, Np - N)))

    grid = (Mp // tm, Np // tn, K // tk)

    cost = pl.CostEstimate(
        flops=2 * M * N * K,
        transcendentals=0,
        bytes_accessed=(Mp * K * x_bytes            # activations read once
                        + (Mp // tm) * Np * K * 2   # weight re-read per i
                        + Mp * Np * out_bytes       # output write
                        + Np * 4))                  # bias

    if fused:
        # j must stay on one core (its j==0 prologue fills the xq scratch),
        # so only the i axis is megacore-parallel.
        cparams = pltpu.CompilerParams(
            dimension_semantics=("parallel", "arbitrary", "arbitrary"),
            vmem_limit_bytes=int(vmem_budget))
        kernel = functools.partial(
            _quant_linear_kernel, smooth=smooth, act_quant=act_quant,
            act_pertoken=act_pertoken, act_bits=act_bits, tk=tk, K=K)
        out = pl.pallas_call(
            kernel,
            out_shape=jax.ShapeDtypeStruct((Mp, Np), out_dtype),
            grid=grid,
            in_specs=[
                pl.BlockSpec(memory_space=pltpu.MemorySpace.SMEM),  # pt triple
                pl.BlockSpec((1, K), lambda i, j, k: (0, 0)),       # 1/smooth
                pl.BlockSpec((tm, K), lambda i, j, k: (i, 0)),      # x tile
                pl.BlockSpec((tk, tn), lambda i, j, k: (k, j)),     # weight
                pl.BlockSpec((1, tn), lambda i, j, k: (0, j)),      # bias
            ],
            out_specs=pl.BlockSpec((tm, tn), lambda i, j, k: (i, j)),
            scratch_shapes=[
                pltpu.VMEM((tm, K), matmul_dtype),   # cached quantized x
                pltpu.VMEM((tm, tn), jnp.float32),   # f32 accumulator
            ],
            compiler_params=cparams,
            cost_estimate=cost,
        )(pt, inv_ss, x_dev, w, b)
    else:
        # Plain linear: standard streamed bf16 matmul, no full-K residency.
        cparams = pltpu.CompilerParams(
            dimension_semantics=("parallel", "parallel", "arbitrary"),
            vmem_limit_bytes=int(vmem_budget))
        out = pl.pallas_call(
            _plain_linear_kernel,
            out_shape=jax.ShapeDtypeStruct((Mp, Np), out_dtype),
            grid=grid,
            in_specs=[
                pl.BlockSpec((tm, tk), lambda i, j, k: (i, k)),     # x tile
                pl.BlockSpec((tk, tn), lambda i, j, k: (k, j)),     # weight
                pl.BlockSpec((1, tn), lambda i, j, k: (0, j)),      # bias
            ],
            out_specs=pl.BlockSpec((tm, tn), lambda i, j, k: (i, j)),
            scratch_shapes=[pltpu.VMEM((tm, tn), jnp.float32)],
            compiler_params=cparams,
            cost_estimate=cost,
        )(x_dev, w, b)

    if Mp != M or Np != N:
        out = out[:M, :N]
    return out


# ---------------------------------------------------------------------------
# Pure-JAX reference (mirrors the PyTorch module; x routed through the same
# bf16 stream dtype so quant bins match the kernel).
# ---------------------------------------------------------------------------
def _reference_forward(x, weight, bias, smooth_scales, *, smooth=False,
                       act_quant=False, act_bits=8, act_pertoken=False,
                       stream_dtype=jnp.bfloat16):
    xf = x.astype(stream_dtype).astype(jnp.float32)
    if smooth and smooth_scales is not None:
        xf = xf / smooth_scales.astype(jnp.float32)
    if act_quant:
        maxq = float(2 ** act_bits - 1)
        if act_pertoken:
            xmax = jnp.max(xf, axis=1, keepdims=True)
            xmin = jnp.min(xf, axis=1, keepdims=True)
            scale = jnp.clip((xmax - xmin) / maxq, EPS, 10000.0)
            zero = jnp.round(-xmin / scale)
            q = jnp.clip(jnp.round(xf / scale) + zero, 0.0, maxq)
            xf = scale * (q - zero)
        else:
            xmax = jnp.max(xf)
            xmin = jnp.min(xf)
            scale = (xmax - xmin) / maxq
            zero = jnp.round(-xmin / scale)
            q = jnp.clip(jnp.round(xf / scale) + zero, 0.0, maxq)
            xf = scale * (q - zero)
    y = xf @ weight.astype(jnp.float32).T
    if bias is not None:
        y = y + bias.astype(jnp.float32)
    return y


if __name__ == "__main__":
    # Small shapes: 2 sequences x 8 tokens -> 16 tokens, hidden 32 -> 64.
    M, K, N = 16, 32, 64   # tokens, in_features, out_features

    key = jax.random.PRNGKey(0)
    kx, kw, ks = jax.random.split(key, 3)

    # Deterministic synthetic parameters (module __init__: randn weight, zero bias).
    x = jax.random.normal(kx, (M, K), dtype=jnp.float32)
    weight = jax.random.normal(kw, (N, K), dtype=jnp.float32)
    bias = jnp.zeros((1, N), dtype=jnp.float32)
    # Positive smooth scales (stand-in for act_scales^a / weight_scales^(1-a)).
    smooth_scales = jnp.abs(jax.random.normal(ks, (K,), dtype=jnp.float32)) + 0.1

    # Path 1: smooth + per-token asymmetric activation fake-quant + linear.
    y1 = smooth_quant_linear(
        x, weight, bias, smooth_scales,
        smooth=True, act_quant=True, act_bits=8, act_pertoken=True)
    jax.block_until_ready(y1)

    # Path 2: per-tensor activation fake-quant + linear (no smoothing).
    y2 = smooth_quant_linear(
        x, weight, bias, None,
        smooth=False, act_quant=True, act_bits=8, act_pertoken=False)
    jax.block_until_ready(y2)

    # Path 3: plain linear (smooth=False, act_quant=False).
    y3 = smooth_quant_linear(x, weight, bias)
    jax.block_until_ready(y3)

    assert y1.shape == (M, N) and y2.shape == (M, N) and y3.shape == (M, N)

    r1 = _reference_forward(x, weight, bias, smooth_scales,
                            smooth=True, act_quant=True, act_pertoken=True)
    r2 = _reference_forward(x, weight, bias, None,
                            smooth=False, act_quant=True, act_pertoken=False)
    r3 = _reference_forward(x, weight, bias, None)
    # Generous tolerance: kernel runs the matmul on bf16 MXU operands.
    assert jnp.allclose(y1, r1, atol=0.5, rtol=0.05)
    assert jnp.allclose(y2, r2, atol=0.5, rtol=0.05)
    assert jnp.allclose(y3, r3, atol=0.5, rtol=0.05)

    print("KERNEL_OK")
</pallas_src>

<mosaic_0001>
module attributes {stable_mosaic.version = 11 : i64} {
  func.func @_quant_linear_kernel(%arg0: i32, %arg1: i32, %arg2: i32, %arg3: memref<3xf32, #tpu.memory_space<smem>>, %arg4: memref<1x32xf32, #tpu.memory_space<vmem>>, %arg5: memref<16x32xbf16, #tpu.memory_space<vmem>>, %arg6: memref<32x64xbf16, #tpu.memory_space<vmem>>, %arg7: memref<1x64xf32, #tpu.memory_space<vmem>>, %arg8: memref<16x64xf32, #tpu.memory_space<vmem>>, %arg9: memref<16x32xbf16, #tpu.memory_space<vmem>>, %arg10: memref<16x64xf32, #tpu.memory_space<vmem>>) attributes {dimension_semantics = [#tpu.dimension_semantics<parallel>, #tpu.dimension_semantics<arbitrary>, #tpu.dimension_semantics<arbitrary>], iteration_bounds = array<i64: 1, 1, 1>, scalar_prefetch = 0 : i64, scratch_operands = 2 : i64, tpu.core_type = #tpu.core_type<tc>, window_params = [{transform_indices = @transform_0, window_bounds = array<i64: 3>}, {pipeline_mode = #tpu.pipeline_mode<synchronous>, transform_indices = @transform_1, window_bounds = array<i64: 1, 32>}, {transform_indices = @transform_2, window_bounds = array<i64: 16, 32>}, {transform_indices = @transform_3, window_bounds = array<i64: 32, 64>}, {transform_indices = @transform_4, window_bounds = array<i64: 1, 64>}, {transform_indices = @transform_5, window_bounds = array<i64: 16, 64>}]} {
    %c0_i32 = arith.constant 0 : i32
    %0 = arith.cmpi eq, %arg1, %c0_i32 : i32
    %c0_i32_0 = arith.constant 0 : i32
    %1 = arith.cmpi eq, %arg2, %c0_i32_0 : i32
    %2 = arith.andi %0, %1 : i1
    %3 = arith.extui %2 : i1 to i32
    %c0_i32_1 = arith.constant 0 : i32
    %4 = arith.cmpi ne, %3, %c0_i32_1 : i32
    scf.if %4 {
      %c0_11 = arith.constant 0 : index
      %c0_12 = arith.constant 0 : index
      %17 = vector.load %arg5[%c0_11, %c0_12] : memref<16x32xbf16, #tpu.memory_space<vmem>>, vector<16x32xbf16>
      %18 = arith.extf %17 : vector<16x32xbf16> to vector<16x32xf32>
      %c0_13 = arith.constant 0 : index
      %c0_14 = arith.constant 0 : index
      %19 = vector.load %arg4[%c0_13, %c0_14] : memref<1x32xf32, #tpu.memory_space<vmem>>, vector<1x32xf32>
      %20 = vector.broadcast %19 : vector<1x32xf32> to vector<16x32xf32>
      %21 = arith.mulf %18, %20 : vector<16x32xf32>
      %cst_15 = arith.constant dense<0xFF800000> : vector<16xf32>
      %22 = vector.multi_reduction <maximumf>, %21, %cst_15 [1] : vector<16x32xf32> to vector<16xf32>
      %23 = vector.shape_cast %22 : vector<16xf32> to vector<16x1xf32>
      %cst_16 = arith.constant dense<0x7F800000> : vector<16xf32>
      %24 = vector.multi_reduction <minimumf>, %21, %cst_16 [1] : vector<16x32xf32> to vector<16xf32>
      %25 = vector.shape_cast %24 : vector<16xf32> to vector<16x1xf32>
      %26 = arith.subf %23, %25 : vector<16x1xf32>
      %cst_17 = arith.constant 2.550000e+02 : f32
      %27 = vector.broadcast %cst_17 : f32 to vector<16x1xf32>
      %28 = arith.divf %26, %27 : vector<16x1xf32>
      %cst_18 = arith.constant 9.99999993E-9 : f32
      %cst_19 = arith.constant 1.000000e+04 : f32
      %29 = vector.broadcast %cst_18 : f32 to vector<16x1xf32>
      %30 = arith.maximumf %29, %28 : vector<16x1xf32>
      %31 = vector.broadcast %cst_19 : f32 to vector<16x1xf32>
      %32 = arith.minimumf %31, %30 : vector<16x1xf32>
      %33 = tpu.reciprocal %32 : vector<16x1xf32> -> vector<16x1xf32>
      %cst_20 = arith.constant 0.000000e+00 : f32
      %34 = vector.broadcast %cst_20 : f32 to vector<16x1xf32>
      %35 = arith.subf %34, %25 : vector<16x1xf32>
      %36 = arith.mulf %35, %33 : vector<16x1xf32>
      %37 = math.roundeven %36 : vector<16x1xf32>
      %38 = vector.broadcast %33 : vector<16x1xf32> to vector<16x32xf32>
      %39 = arith.mulf %21, %38 : vector<16x32xf32>
      %40 = math.roundeven %39 : vector<16x32xf32>
      %41 = vector.broadcast %37 : vector<16x1xf32> to vector<16x32xf32>
      %42 = arith.addf %40, %41 : vector<16x32xf32>
      %cst_21 = arith.constant 0.000000e+00 : f32
      %cst_22 = arith.constant 2.550000e+02 : f32
      %43 = vector.broadcast %cst_21 : f32 to vector<16x32xf32>
      %44 = arith.maximumf %43, %42 : vector<16x32xf32>
      %45 = vector.broadcast %cst_22 : f32 to vector<16x32xf32>
      %46 = arith.minimumf %45, %44 : vector<16x32xf32>
      %47 = vector.broadcast %37 : vector<16x1xf32> to vector<16x32xf32>
      %48 = arith.subf %46, %47 : vector<16x32xf32>
      %49 = vector.broadcast %32 : vector<16x1xf32> to vector<16x32xf32>
      %50 = arith.mulf %49, %48 : vector<16x32xf32>
      %51 = arith.truncf %50 : vector<16x32xf32> to vector<16x32xbf16>
      %c0_23 = arith.constant 0 : index
      %c0_24 = arith.constant 0 : index
      %52 = vector.load %arg9[%c0_23, %c0_24] : memref<16x32xbf16, #tpu.memory_space<vmem>>, vector<16x32xbf16>
      tpu.vector_store %arg9[%c0_23, %c0_24], %51 {strides = array<i32>} : memref<16x32xbf16, #tpu.memory_space<vmem>>, vector<16x32xbf16>,
    } else {
    }
    %c0 = arith.constant 0 : index
    %c0_2 = arith.constant 0 : index
    %5 = vector.load %arg9[%c0, %c0_2] : memref<16x32xbf16, #tpu.memory_space<vmem>>, vector<16x32xbf16>
    %c0_3 = arith.constant 0 : index
    %c0_4 = arith.constant 0 : index
    %6 = vector.load %arg6[%c0_3, %c0_4] : memref<32x64xbf16, #tpu.memory_space<vmem>>, vector<32x64xbf16>
    %cst = arith.constant dense<0.000000e+00> : vector<16x64xf32>
    %7 = tpu.matmul %5, %6, %cst {dimension_numbers = #tpu.dot_dimension_numbers<[1], [0], [0], [1], [0, 0, 1, 1], [], []>} : vector<16x32xbf16>, vector<32x64xbf16>, vector<16x64xf32> -> vector<16x64xf32>
    %c0_i32_5 = arith.constant 0 : i32
    %8 = arith.cmpi eq, %arg2, %c0_i32_5 : i32
    %9 = arith.extui %8 : i1 to i32
    %c0_i32_6 = arith.constant 0 : i32
    %10 = arith.cmpi ne, %9, %c0_i32_6 : i32
    scf.if %10 {
      %c0_11 = arith.constant 0 : index
      %c0_12 = arith.constant 0 : index
      %17 = vector.load %arg10[%c0_11, %c0_12] : memref<16x64xf32, #tpu.memory_space<vmem>>, vector<16x64xf32>
      tpu.vector_store %arg10[%c0_11, %c0_12], %7 {strides = array<i32>} : memref<16x64xf32, #tpu.memory_space<vmem>>, vector<16x64xf32>,
    } else {
    }
    %c0_i32_7 = arith.constant 0 : i32
    %11 = arith.cmpi ne, %arg2, %c0_i32_7 : i32
    %12 = arith.extui %11 : i1 to i32
    %c0_i32_8 = arith.constant 0 : i32
    %13 = arith.cmpi ne, %12, %c0_i32_8 : i32
    scf.if %13 {
      %c0_11 = arith.constant 0 : index
      %c0_12 = arith.constant 0 : index
      %17 = vector.load %arg10[%c0_11, %c0_12] : memref<16x64xf32, #tpu.memory_space<vmem>>, vector<16x64xf32>
      %18 = arith.addf %17, %7 : vector<16x64xf32>
      %c0_13 = arith.constant 0 : index
      %c0_14 = arith.constant 0 : index
      %19 = vector.load %arg10[%c0_13, %c0_14] : memref<16x64xf32, #tpu.memory_space<vmem>>, vector<16x64xf32>
      tpu.vector_store %arg10[%c0_13, %c0_14], %18 {strides = array<i32>} : memref<16x64xf32, #tpu.memory_space<vmem>>, vector<16x64xf32>,
    } else {
    }
    %c0_i32_9 = arith.constant 0 : i32
    %14 = arith.cmpi eq, %arg2, %c0_i32_9 : i32
    %15 = arith.extui %14 : i1 to i32
    %c0_i32_10 = arith.constant 0 : i32
    %16 = arith.cmpi ne, %15, %c0_i32_10 : i32
    scf.if %16 {
      %c0_11 = arith.constant 0 : index
      %c0_12 = arith.constant 0 : index
      %17 = vector.load %arg10[%c0_11, %c0_12] : memref<16x64xf32, #tpu.memory_space<vmem>>, vector<16x64xf32>
      %c0_13 = arith.constant 0 : index
      %c0_14 = arith.constant 0 : index
      %18 = vector.load %arg7[%c0_13, %c0_14] : memref<1x64xf32, #tpu.memory_space<vmem>>, vector<1x64xf32>
      %19 = vector.broadcast %18 : vector<1x64xf32> to vector<16x64xf32>
      %20 = arith.addf %17, %19 : vector<16x64xf32>
      %c0_15 = arith.constant 0 : index
      %c0_16 = arith.constant 0 : index
      %21 = vector.load %arg8[%c0_15, %c0_16] : memref<16x64xf32, #tpu.memory_space<vmem>>, vector<16x64xf32>
      tpu.vector_store %arg8[%c0_15, %c0_16], %20 {strides = array<i32>} : memref<16x64xf32, #tpu.memory_space<vmem>>, vector<16x64xf32>,
    } else {
    }
    return
  }
  func.func @transform_0(%arg0: i32, %arg1: i32, %arg2: i32) -> i32 {
    %c0_i32 = arith.constant 0 : i32
    %c0_i32_0 = arith.constant 0 : i32
    return %c0_i32 : i32
  }
  func.func @transform_1(%arg0: i32, %arg1: i32, %arg2: i32) -> (i32, i32) {
    %c0_i32 = arith.constant 0 : i32
    %c0_i32_0 = arith.constant 0 : i32
    %c0_i32_1 = arith.constant 0 : i32
    return %c0_i32, %c0_i32_0 : i32, i32
  }
  func.func @transform_2(%arg0: i32, %arg1: i32, %arg2: i32) -> (i32, i32) {
    %c0_i32 = arith.constant 0 : i32
    %c0_i32_0 = arith.constant 0 : i32
    return %arg0, %c0_i32 : i32, i32
  }
  func.func @transform_3(%arg0: i32, %arg1: i32, %arg2: i32) -> (i32, i32) {
    %c0_i32 = arith.constant 0 : i32
    return %arg2, %arg1 : i32, i32
  }
  func.func @transform_4(%arg0: i32, %arg1: i32, %arg2: i32) -> (i32, i32) {
    %c0_i32 = arith.constant 0 : i32
    %c0_i32_0 = arith.constant 0 : i32
    return %c0_i32, %arg1 : i32, i32
  }
  func.func @transform_5(%arg0: i32, %arg1: i32, %arg2: i32) -> (i32, i32) {
    %c0_i32 = arith.constant 0 : i32
    return %arg0, %arg1 : i32, i32
  }
}

</mosaic_0001>

<llo_original>
// kernel: tpu_custom_call.1
$region0: #{tpu_custom_call.1}
  #allocation0 [shape = 'u32[]', space=smem, size = 0x4, offset = 0x4, fixed_abs, tag = 'smem constant byte address 0x4 - core index']
  #allocation1 [shape = 'u32[72,128]{1,0:T(1,128)}', space=vmem, size = 0x9000, scoped, tag = 'internal scratch']
  #allocation2 [shape = 'bf16[16,32]{1,0:T(8,128)(2,1)}', space=vmem, size = 0x1000, scoped, tag = 'scratch operand']
  #allocation3 [shape = 'f32[16,64]{1,0:T(8,128)}', space=vmem, size = 0x2000, scoped, tag = 'scratch operand']
  %s0 = inlined_call_operand.hbm [shape: f32[3], index: 0, kind: input, shape index: {}]
  %s1 = inlined_call_operand.hbm [shape: f32[1,32], index: 1, kind: input, shape index: {}]
  %s2 = inlined_call_operand.hbm [shape: bf16[16,32], index: 2, kind: input, shape index: {}]
  %s3 = inlined_call_operand.hbm [shape: bf16[32,64], index: 3, kind: input, shape index: {}]
  %s4 = inlined_call_operand.vmem [shape: f32[1,64], index: 4, kind: input, shape index: {}]
  %s5 = inlined_call_operand.hbm [shape: f32[16,64], index: 5, kind: output, shape index: {}]
  %s6 = sld [smem:[#allocation0]]
  $region62: #{tpu_custom_call.1} parent=0
    _
  %s8 = ssub.s32 1, %s6
  %s9 = scalar_select 0, %s8, %s6
  $region1: #{tpu_custom_call.1} parent=0
    #allocation4 [shape = 'u8[512]{0}', space=smem, size = 0x200, scoped, tag = 'input window, operand 0, single buffered']
    #allocation5 [shape = 's32[1]{0}', space=sflag, size = 0x4, scoped, tag = 'scoped memory for tpu_custom_call.1']
    #allocation6 [shape = 's32[1]{0}', space=sflag, size = 0x4, scoped, tag = 'scoped memory for tpu_custom_call.1']
    #allocation7 [shape = 's32[1]{0}', space=sflag, size = 0x4, scoped, tag = 'scoped memory for tpu_custom_call.1']
    #allocation8 [shape = 'u8[512]{0}', space=vmem, size = 0x400, scoped, tag = 'input window, operand 1, single buffered']
    #allocation9 [shape = 'u8[4096]{0}', space=vmem, size = 0x1000, scoped, tag = 'input window, operand 2, single buffered']
    #allocation10 [shape = 's32[1]{0}', space=sflag, size = 0x4, scoped, tag = 'scoped memory for tpu_custom_call.1']
    #allocation11 [shape = 'u8[8192]{0}', space=vmem, size = 0x2000, scoped, tag = 'input window, operand 3, single buffered']
    #allocation12 [shape = 'u8[8192]{0}', space=vmem, size = 0x2000, scoped, tag = 'output window, operand 0, single buffered']
    %10 = vsyncpa [#allocation7], 0
    %11 = vsyncpa [#allocation5], 0
    %12 = vsyncpa [#allocation10], 0
    %13 = vsyncpa [#allocation6], 0
    // Predicated region
    $region2: #{tpu_custom_call.1} parent=1 // pred_check
      _
    $region3: #{tpu_custom_call.1} parent=1 // pred_check_branch
      %15 = sbr.rel (0) target = $region5
    $region4: #{tpu_custom_call.1} parent=1 // pred_region
      %17 = vsyncadd [#allocation7], 0
      %s19 = sshll.u32 %s0, 4
      %s20 = int_to_ptr.hbm [resolvable:$true] %s19
      %22 = dma.hbm_to_smem %s20, 16, [#allocation4], [#allocation7]
    $region5: #{tpu_custom_call.1} parent=1 // pred_fallthru
      _
    // Predicated region
    $region6: #{tpu_custom_call.1} parent=1 // pred_check
      _
    $region7: #{tpu_custom_call.1} parent=1 // pred_check_branch
      %24 = sbr.rel (0) target = $region9
    $region8: #{tpu_custom_call.1} parent=1 // pred_region
      %26 = vsyncadd [#allocation5], 0
      %s28 = sshll.u32 %s1, 4
      %s29 = int_to_ptr.hbm [resolvable:$true] %s28
      %s30 = sshll.u32 [#allocation8], 4
      %s31 = int_to_ptr.vmem [resolvable:$true] %s30
      %33 = dma.hbm_to_vmem [thread:$0]  %s29, 16, %s31, [#allocation5]
    $region9: #{tpu_custom_call.1} parent=1 // pred_fallthru
      _
    // Predicated region
    $region10: #{tpu_custom_call.1} parent=1 // pred_check
      _
    $region11: #{tpu_custom_call.1} parent=1 // pred_check_branch
      %35 = sbr.rel (0) target = $region13
    $region12: #{tpu_custom_call.1} parent=1 // pred_region
      %37 = vsyncadd [#allocation10], 0
      %s38 = sshll.u32 %s2, 4
      %s39 = int_to_ptr.hbm [resolvable:$true] %s38
      %s40 = sshll.u32 [#allocation9], 4
      %s41 = int_to_ptr.vmem [resolvable:$true] %s40
      %46 = dma.hbm_to_vmem [thread:$0]  %s39, 128, %s41, [#allocation10], 64, 64, 4
    $region13: #{tpu_custom_call.1} parent=1 // pred_fallthru
      _
    // Predicated region
    $region14: #{tpu_custom_call.1} parent=1 // pred_check
      _
    $region15: #{tpu_custom_call.1} parent=1 // pred_check_branch
      %48 = sbr.rel (0) target = $region17
    $region16: #{tpu_custom_call.1} parent=1 // pred_region
      %50 = vsyncadd [#allocation10], 0
      %s51 = sshll.u32 %s3, 4
      %s52 = int_to_ptr.hbm [resolvable:$true] %s51
      %s53 = sshll.u32 [#allocation11], 4
      %s54 = int_to_ptr.vmem [resolvable:$true] %s53
      %59 = dma.hbm_to_vmem [thread:$0]  %s52, 256, %s54, [#allocation10], 64, 64, 4
    $region17: #{tpu_custom_call.1} parent=1 // pred_fallthru
      _
    // Predicated region
    $region18: #{tpu_custom_call.1} parent=1 // pred_check
      _
    $region19: #{tpu_custom_call.1} parent=1 // pred_check_branch
      %61 = sbr.rel (0) target = $region21
    $region20: #{tpu_custom_call.1} parent=1 // pred_region
      _
    $region21: #{tpu_custom_call.1} parent=1 // pred_fallthru
      _
    // Predicated region
    $region22: #{tpu_custom_call.1} parent=1 // pred_check
      _
    $region23: #{tpu_custom_call.1} parent=1 // pred_check_branch
      %63 = sbr.rel (0) target = $region25
    $region24: #{tpu_custom_call.1} parent=1 // pred_region
      %65 = dma.done [#allocation7], 16
    $region25: #{tpu_custom_call.1} parent=1 // pred_fallthru
      _
    // Predicated region
    $region26: #{tpu_custom_call.1} parent=1 // pred_check
      _
    $region27: #{tpu_custom_call.1} parent=1 // pred_check_branch
      %67 = sbr.rel (0) target = $region29
    $region28: #{tpu_custom_call.1} parent=1 // pred_region
      %69 = dma.done [#allocation5], 16
    $region29: #{tpu_custom_call.1} parent=1 // pred_fallthru
      _
    // Predicated region
    $region30: #{tpu_custom_call.1} parent=1 // pred_check
      _
    $region31: #{tpu_custom_call.1} parent=1 // pred_check_branch
      %71 = sbr.rel (0) target = $region33
    $region32: #{tpu_custom_call.1} parent=1 // pred_region
      %73 = dma.done [#allocation10], 128
    $region33: #{tpu_custom_call.1} parent=1 // pred_fallthru
      _
    // Predicated region
    $region34: #{tpu_custom_call.1} parent=1 // pred_check
      _
    $region35: #{tpu_custom_call.1} parent=1 // pred_check_branch
      %75 = sbr.rel (0) target = $region37
    $region36: #{tpu_custom_call.1} parent=1 // pred_region
      %77 = dma.done [#allocation10], 256
    $region37: #{tpu_custom_call.1} parent=1 // pred_fallthru
      _
    %78 = sfence
    %p80 = scmp.eq.s32.totalorder 0, 0
    %p81 = scmp.eq.s32.totalorder 0, 0
    %p82 = pnand %p80, %p81
    %p83 = pneg %p82
    // Predicated region
    $region38: #{tpu_custom_call.1} parent=1 // pred_check
      _
    $region39: #{tpu_custom_call.1} parent=1 // pred_check_branch
      %85 = sbr.rel (%p82) target = $region41
    $region40: #{tpu_custom_call.1} parent=1 // pred_region
      %v86 = vld [vmem:[#allocation9] sm:$0xf]
      %v87 = vld [vmem:[#allocation9 + $0x4] sm:$0xf]
      %v88 = vunpack.c.l.bf16 %v86
      %v89 = vunpack.c.l.bf16 %v87
      %v90 = vld [vmem:[#allocation8] sm:$0x1]
      %v92 = vperm.slane %v90, 0
      %v94 = vmul.f32 %v88, %v92
      %v95 = vmul.f32 %v89, %v92
      %vm96 = vcmask 261120
      %v97 = vsel %vm96, %v94, -inf
      %98 = vmax.xlane.f32.xlu0 %v97
      %v99 = vpop.xlane.xlu0 %98
      %v100 = vsel %vm96, %v95, -inf
      %101 = vmax.xlane.f32.xlu0 %v100
      %v102 = vpop.xlane.xlu0 %101
      %v103 = vsel %vm96, %v94, inf
      %104 = vmin.xlane.f32.xlu0 %v103
      %v105 = vpop.xlane.xlu0 %104
      %v106 = vsel %vm96, %v95, inf
      %107 = vmin.xlane.f32.xlu0 %v106
      %v108 = vpop.xlane.xlu0 %107
      %v109 = vsub.f32 %v99, %v105
      %v110 = vsub.f32 %v102, %v108
      %v111 = vrcp.pop 255.0
      %v112 = vmul.f32 255.0, %v111
      %v113 = vsub.f32 1.0, %v112
      %v114 = vmul.f32 %v111, %v113
      %v115 = vadd.f32 %v111, %v114
      %vm116 = vweird.f32 %v111
      %v117 = vsel %vm116, %v111, %v115
      %v118 = vmul.f32 %v109, %v117
      %v119 = vmul.f32 %v110, %v117
      %v120 = vmax.f32 %v118, 1e-08
      %v121 = vmax.f32 %v119, 1e-08
      %v122 = vmin.f32 %v120, 10000.0
      %v123 = vmin.f32 %v121, 10000.0
      %v124 = vrcp.pop %v122
      %v125 = vmul.f32 %v122, %v124
      %v126 = vsub.f32 1.0, %v125
      %v127 = vmul.f32 %v124, %v126
      %v128 = vadd.f32 %v124, %v127
      %vm129 = vweird.f32 %v122
      %vm130 = vweird.f32 %v124
      %vm131 = vmor %vm129, %vm130
      %v132 = vsel %vm131, %v124, %v128
      %v133 = vand.u32 2147483647, %v122
      %vm134 = vcmp.eq.f32.partialorder %v133, 8.507059e+37
      %v135 = vand.u32 %v122, 2147483648
      %v136 = vor.u32 1.1754944e-38, %v135
      %v137 = vsel %vm134, %v136, %v132
      %v138 = vrcp.pop %v123
      %v139 = vmul.f32 %v123, %v138
      %v140 = vsub.f32 1.0, %v139
      %v141 = vmul.f32 %v138, %v140
      %v142 = vadd.f32 %v138, %v141
      %vm143 = vweird.f32 %v123
      %vm144 = vweird.f32 %v138
      %vm145 = vmor %vm143, %vm144
      %v146 = vsel %vm145, %v138, %v142
      %v147 = vand.u32 2147483647, %v123
      %vm148 = vcmp.eq.f32.partialorder %v147, 8.507059e+37
      %v149 = vand.u32 %v123, 2147483648
      %v150 = vor.u32 1.1754944e-38, %v149
      %v151 = vsel %vm148, %v150, %v146
      %v152 = vsub.f32 0.0, %v105
      %v153 = vsub.f32 0.0, %v108
      %v154 = vmul.f32 %v152, %v137
      %v155 = vmul.f32 %v153, %v151
      %v156 = vround.ne.pseudo %v154
      %v157 = vround.ne.pseudo %v155
      %v158 = vmul.f32 %v94, %v137
      %v159 = vmul.f32 %v95, %v151
      %v160 = vround.ne.pseudo %v158
      %v161 = vround.ne.pseudo %v159
      %v162 = vadd.f32 %v160, %v156
      %v163 = vadd.f32 %v161, %v157
      %v164 = vmax.f32 %v162, 0.0
      %v165 = vmax.f32 %v163, 0.0
      %v166 = vmin.f32 %v164, 255.0
      %v167 = vmin.f32 %v165, 255.0
      %v168 = vsub.f32 %v166, %v156
      %v169 = vsub.f32 %v167, %v157
      %v170 = vmul.f32 %v122, %v168
      %v171 = vmul.f32 %v123, %v169
      %v172 = vpack.c.bf16 %v170, %v170
      %v173 = vpack.c.bf16 %v171, %v171
      %vm174 = vcmask 257024
      %175 = vst.msk [vmem:[#allocation2] sm:$0xf] %vm174, %v172
      %176 = vst.msk [vmem:[#allocation2 + $0x4] sm:$0xf] %vm174, %v173
    $region41: #{tpu_custom_call.1} parent=1 // pred_fallthru
      _
    %v177 = vld [vmem:[#allocation2] sm:$0xf]
    %v178 = vld [vmem:[#allocation2 + $0x4] sm:$0xf]
    %v179 = vld [vmem:[#allocation11] sm:$0xf]
    %v180 = vld [vmem:[#allocation11 + $0x4] sm:$0xf]
    %v181 = vld [vmem:[#allocation11 + $0x8] sm:$0xf]
    %v182 = vld [vmem:[#allocation11 + $0xc] sm:$0xf]
    %v185 = vunpack.c.l.b16 %v177
    %v186 = vunpack.c.l.b16 %v178
    %v187 = vpack.c.b16 %v186, %v185
    %v192 = vunpack.c.l.b16 %v179
    %v193 = vunpack.c.l.b16 %v180
    %v194 = vunpack.c.l.b16 %v181
    %v195 = vunpack.c.l.b16 %v182
    %v196 = vpack.c.b16 %v193, %v192
    %v197 = vpack.c.b16 %v195, %v194
    %vm200 = vcmask 261120
    %v202 = vsel %vm200, %v187, 0
    %204 = vmatpush.bf16.msra.mxu0 0
    %205 = vmatpush.bf16.msra.mxu0 0
    %206 = vmatpush.bf16.msra.mxu0 0
    %207 = vmatpush.bf16.msra.mxu0 0
    %208 = vmatpush.bf16.msra.mxu0 0
    %209 = vmatpush.bf16.msra.mxu0 0
    %210 = vmatpush.bf16.msra.mxu0 %v197
    %211 = vmatpush.bf16.msra.mxu0 %v196
    %212 = vmatmul.bf16.gmra.mxu0 %v202
    %v213 = vpop.f32.mrf.mxu0
    %v214 = vadd.f32 0.0, %v213
    %v215 = vpop.f32.mrf.mxu0
    %v216 = vadd.f32 0.0, %v215
    %217 = vdwg.mxu0
    // Predicated region
    $region42: #{tpu_custom_call.1} parent=1 // pred_check
      %p218 = pneg %p81
    $region43: #{tpu_custom_call.1} parent=1 // pred_check_branch
      %220 = sbr.rel (%p218) target = $region45
    $region44: #{tpu_custom_call.1} parent=1 // pred_region
      %vm221 = vcmask 523264
      %222 = vst.msk [vmem:[#allocation3] sm:$0xff] %vm221, %v214
      %223 = vst.msk [vmem:[#allocation3 + $0x8] sm:$0xff] %vm221, %v216
    $region45: #{tpu_custom_call.1} parent=1 // pred_fallthru
      _
    %p224 = scmp.ne.s32.totalorder 0, 0
    // Predicated region
    $region46: #{tpu_custom_call.1} parent=1 // pred_check
      %p225 = pneg %p224
    $region47: #{tpu_custom_call.1} parent=1 // pred_check_branch
      %227 = sbr.rel (%p225) target = $region49
    $region48: #{tpu_custom_call.1} parent=1 // pred_region
      %v228 = vld [vmem:[#allocation3] sm:$0xff]
      %v229 = vld [vmem:[#allocation3 + $0x8] sm:$0xff]
      %v230 = vadd.f32 %v228, %v214
      %v231 = vadd.f32 %v229, %v216
      %vm232 = vcmask 523264
      %233 = vst.msk [vmem:[#allocation3] sm:$0xff] %vm232, %v230
      %234 = vst.msk [vmem:[#allocation3 + $0x8] sm:$0xff] %vm232, %v231
    $region49: #{tpu_custom_call.1} parent=1 // pred_fallthru
      _
    // Predicated region
    $region50: #{tpu_custom_call.1} parent=1 // pred_check
      %p235 = pneg %p81
    $region51: #{tpu_custom_call.1} parent=1 // pred_check_branch
      %237 = sbr.rel (%p235) target = $region53
    $region52: #{tpu_custom_call.1} parent=1 // pred_region
      %v238 = vld [vmem:[#allocation3] sm:$0xff]
      %v239 = vld [vmem:[#allocation3 + $0x8] sm:$0xff]
      %v240 = vld [vmem:[%s4] sm:$0x1]
      %v242 = vperm.slane %v240, 0
      %v244 = vadd.f32 %v238, %v242
      %v245 = vadd.f32 %v239, %v242
      %vm246 = vcmask 523264
      %247 = vst.msk [vmem:[#allocation12] sm:$0xff] %vm246, %v244
      %248 = vst.msk [vmem:[#allocation12 + $0x8] sm:$0xff] %vm246, %v245
    $region53: #{tpu_custom_call.1} parent=1 // pred_fallthru
      _
    // Predicated region
    $region54: #{tpu_custom_call.1} parent=1 // pred_check
      _
    $region55: #{tpu_custom_call.1} parent=1 // pred_check_branch
      %250 = sbr.rel (0) target = $region57
    $region56: #{tpu_custom_call.1} parent=1 // pred_region
      %252 = vsyncadd [#allocation6], 0
      %s253 = sshll.u32 [#allocation12], 4
      %s254 = int_to_ptr.vmem [resolvable:$true] %s253
      %s255 = sshll.u32 %s5, 4
      %s256 = int_to_ptr.hbm [resolvable:$true] %s255
      %261 = dma.vmem_to_hbm [thread:$0]  %s254, 256, %s256, [#allocation6], 128, 128, 8
    $region57: #{tpu_custom_call.1} parent=1 // pred_fallthru
      _
    // Predicated region
    $region58: #{tpu_custom_call.1} parent=1 // pred_check
      _
    $region59: #{tpu_custom_call.1} parent=1 // pred_check_branch
      %263 = sbr.rel (0) target = $region61
    $region60: #{tpu_custom_call.1} parent=1 // pred_region
      %265 = dma.done [#allocation6], 256
    $region61: #{tpu_custom_call.1} parent=1 // pred_fallthru
      _
    %266 = vsyncpa [#allocation5], 1
    %267 = vsyncpa [#allocation10], 1
    %268 = vsyncpa [#allocation6], 1
    %269 = vsyncpa [#allocation7], 1

</llo_original>
